<compile_context>
chip_gen: v5e
topology: v5e:2x2
jax: 0.10.0
libtpu: 0.0.40
codegen_flags: <defaults>
</compile_context>

<pallas_src>
import functools

import jax
import jax.numpy as jnp
from jax.experimental import pallas as pl
from jax.experimental.pallas import tpu as pltpu


H1 = 512
H2 = 256
LEAK = 0.2


def _disc_kernel(x_ref, w1_ref, b1_ref, w2_ref, b2_ref, w3_ref, b3_ref, out_ref):
    # ----- Linear(in_dim, 512) + LeakyReLU(0.2) -----  (bf16 MXU, f32 accumulate)
    h1 = jnp.dot(x_ref[...], w1_ref[...],
                 preferred_element_type=jnp.float32) + b1_ref[...]
    h1 = jnp.maximum(h1, LEAK * h1)

    # ----- Linear(512, 256) + LeakyReLU(0.2) -----
    h2 = jnp.dot(h1.astype(jnp.bfloat16), w2_ref[...],
                 preferred_element_type=jnp.float32) + b2_ref[...]
    h2 = jnp.maximum(h2, LEAK * h2)

    # ----- Linear(256, 1): N=1 -> keep it off the MXU (VPU mul + XLU lane reduce) -----
    h3 = jnp.sum(h2 * w3_ref[...], axis=-1, keepdims=True) + b3_ref[...]

    # ----- numerically-stable Sigmoid (no inf intermediate; exp + recip on EUP) -----
    z = jnp.exp(-jnp.abs(h3))
    inv = pl.reciprocal(1.0 + z, approx=False)
    out_ref[...] = jnp.where(h3 >= 0, inv, z * inv)


@functools.partial(jax.jit, static_argnames=("tb",))
def discriminator_forward(state, action, params, tb=256):
    """state: (B, state_dim) f32, action: (B, 4) f32 -> (B, 1) f32 in (0, 1)."""
    w1, b1, w2, b2, w3_row, b3 = params
    in_dim = w1.shape[0]

    # Concat once in the wrapper, stream activations to the kernel in bf16.
    x = jnp.concatenate([state, action], axis=1).astype(jnp.bfloat16)
    b = x.shape[0]

    # Adaptive batch tile: sublane-aligned (multiple of 8), capped at `tb`.
    tb = min(tb, pl.cdiv(b, 8) * 8)
    bp = pl.cdiv(b, tb) * tb
    if bp != b:
        x = jnp.pad(x, ((0, bp - b), (0, 0)))

    grid = (bp // tb,)
    const = lambda i: (0, 0)   # weights/biases: VMEM-resident, not re-DMA'd per tile

    flops = 2 * bp * (in_dim * H1 + H1 * H2 + H2)
    bytes_accessed = (
        x.size * x.dtype.itemsize
        + w1.size * w1.dtype.itemsize + w2.size * w2.dtype.itemsize
        + (b1.size + b2.size + w3_row.size + b3.size) * 4
        + bp * 4)

    out = pl.pallas_call(
        _disc_kernel,
        out_shape=jax.ShapeDtypeStruct((bp, 1), jnp.float32),
        grid=grid,
        in_specs=[
            pl.BlockSpec((tb, in_dim), lambda i: (i, 0)),   # x tile (bf16)
            pl.BlockSpec((in_dim, H1), const),              # w1 (bf16)
            pl.BlockSpec((1, H1), const),                   # b1 (f32)
            pl.BlockSpec((H1, H2), const),                  # w2 (bf16)
            pl.BlockSpec((1, H2), const),                   # b2 (f32)
            pl.BlockSpec((1, H2), const),                   # w3 row (f32)
            pl.BlockSpec((1, 1), const),                    # b3 (f32)
        ],
        out_specs=pl.BlockSpec((tb, 1), lambda i: (i, 0)),
        compiler_params=pltpu.CompilerParams(
            dimension_semantics=("parallel",)),
        cost_estimate=pl.CostEstimate(
            flops=flops, transcendentals=2 * bp, bytes_accessed=bytes_accessed),
    )(x, w1, b1, w2, b2, w3_row, b3)

    return out[:b]


def init_params(state_dim, key):
    """PyTorch-Linear-style init (uniform +/- 1/sqrt(fan_in)).
    Weights stored as (in_features, out_features); matmul weights in bf16."""
    in1 = state_dim + 4
    k = jax.random.split(key, 6)

    def uinit(k_, shape, fan_in):
        bound = 1.0 / jnp.sqrt(jnp.float32(fan_in))
        return jax.random.uniform(k_, shape, jnp.float32, -bound, bound)

    w1 = uinit(k[0], (in1, H1), in1).astype(jnp.bfloat16)
    b1 = uinit(k[1], (1, H1), in1)
    w2 = uinit(k[2], (H1, H2), H1).astype(jnp.bfloat16)
    b2 = uinit(k[3], (1, H2), H1)
    w3_row = uinit(k[4], (1, H2), H2)          # kept f32: used on the VPU, not the MXU
    b3 = uinit(k[5], (1, 1), H2)
    return (w1, b1, w2, b2, w3_row, b3)


def _reference_forward(state, action, params):
    """Pure-JAX reference mirroring the kernel's bf16-weight / f32-accumulate path."""
    w1, b1, w2, b2, w3_row, b3 = params
    x = jnp.concatenate([state, action], axis=1).astype(jnp.bfloat16)
    h1 = jnp.dot(x, w1, preferred_element_type=jnp.float32) + b1
    h1 = jnp.maximum(h1, LEAK * h1)
    h2 = jnp.dot(h1.astype(jnp.bfloat16), w2, preferred_element_type=jnp.float32) + b2
    h2 = jnp.maximum(h2, LEAK * h2)
    h3 = jnp.sum(h2 * w3_row, axis=-1, keepdims=True) + b3
    return jax.nn.sigmoid(h3)


if __name__ == "__main__":
    STATE_DIM = 32
    BATCH = 8

    key = jax.random.PRNGKey(0)
    k_state, k_action, k_params = jax.random.split(key, 3)

    state = jax.random.normal(k_state, (BATCH, STATE_DIM), dtype=jnp.float32)
    action = jax.random.normal(k_action, (BATCH, 4), dtype=jnp.float32)

    params = init_params(STATE_DIM, k_params)

    out = discriminator_forward(state, action, params)
    out = jax.block_until_ready(out)

    ref = _reference_forward(state, action, params)
    assert out.shape == (BATCH, 1)
    assert jnp.allclose(out, ref, atol=1e-3, rtol=1e-3), "mismatch vs reference"

    print("KERNEL_OK")
</pallas_src>

<mosaic_0001>
module attributes {stable_mosaic.version = 11 : i64} {
  func.func @_disc_kernel(%arg0: i32, %arg1: memref<8x36xbf16, #tpu.memory_space<vmem>>, %arg2: memref<36x512xbf16, #tpu.memory_space<vmem>>, %arg3: memref<1x512xf32, #tpu.memory_space<vmem>>, %arg4: memref<512x256xbf16, #tpu.memory_space<vmem>>, %arg5: memref<1x256xf32, #tpu.memory_space<vmem>>, %arg6: memref<1x256xf32, #tpu.memory_space<vmem>>, %arg7: memref<1x1xf32, #tpu.memory_space<vmem>>, %arg8: memref<8x1xf32, #tpu.memory_space<vmem>>) attributes {dimension_semantics = [#tpu.dimension_semantics<parallel>], iteration_bounds = array<i64: 1>, scalar_prefetch = 0 : i64, scratch_operands = 0 : i64, tpu.core_type = #tpu.core_type<tc>, window_params = [{transform_indices = @transform_0, window_bounds = array<i64: 8, 36>}, {pipeline_mode = #tpu.pipeline_mode<synchronous>, transform_indices = @transform_1, window_bounds = array<i64: 36, 512>}, {pipeline_mode = #tpu.pipeline_mode<synchronous>, transform_indices = @transform_2, window_bounds = array<i64: 1, 512>}, {pipeline_mode = #tpu.pipeline_mode<synchronous>, transform_indices = @transform_3, window_bounds = array<i64: 512, 256>}, {pipeline_mode = #tpu.pipeline_mode<synchronous>, transform_indices = @transform_4, window_bounds = array<i64: 1, 256>}, {pipeline_mode = #tpu.pipeline_mode<synchronous>, transform_indices = @transform_5, window_bounds = array<i64: 1, 256>}, {pipeline_mode = #tpu.pipeline_mode<synchronous>, transform_indices = @transform_6, window_bounds = array<i64: 1, 1>}, {transform_indices = @transform_7, window_bounds = array<i64: 8, 1>}]} {
    %c0 = arith.constant 0 : index
    %c0_0 = arith.constant 0 : index
    %0 = vector.load %arg1[%c0, %c0_0] : memref<8x36xbf16, #tpu.memory_space<vmem>>, vector<8x36xbf16>
    %c0_1 = arith.constant 0 : index
    %c0_2 = arith.constant 0 : index
    %1 = vector.load %arg2[%c0_1, %c0_2] : memref<36x512xbf16, #tpu.memory_space<vmem>>, vector<36x512xbf16>
    %cst = arith.constant dense<0.000000e+00> : vector<8x512xf32>
    %2 = tpu.matmul %0, %1, %cst {dimension_numbers = #tpu.dot_dimension_numbers<[1], [0], [0], [1], [0, 0, 1, 1], [], []>} : vector<8x36xbf16>, vector<36x512xbf16>, vector<8x512xf32> -> vector<8x512xf32>
    %c0_3 = arith.constant 0 : index
    %c0_4 = arith.constant 0 : index
    %3 = vector.load %arg3[%c0_3, %c0_4] : memref<1x512xf32, #tpu.memory_space<vmem>>, vector<1x512xf32>
    %4 = vector.broadcast %3 : vector<1x512xf32> to vector<8x512xf32>
    %5 = arith.addf %2, %4 : vector<8x512xf32>
    %cst_5 = arith.constant 2.000000e-01 : f32
    %6 = vector.broadcast %cst_5 : f32 to vector<8x512xf32>
    %7 = arith.mulf %6, %5 : vector<8x512xf32>
    %8 = arith.maximumf %5, %7 : vector<8x512xf32>
    %9 = arith.truncf %8 : vector<8x512xf32> to vector<8x512xbf16>
    %c0_6 = arith.constant 0 : index
    %c0_7 = arith.constant 0 : index
    %10 = vector.load %arg4[%c0_6, %c0_7] : memref<512x256xbf16, #tpu.memory_space<vmem>>, vector<512x256xbf16>
    %cst_8 = arith.constant dense<0.000000e+00> : vector<8x256xf32>
    %11 = tpu.matmul %9, %10, %cst_8 {dimension_numbers = #tpu.dot_dimension_numbers<[1], [0], [0], [1], [0, 0, 1, 1], [], []>} : vector<8x512xbf16>, vector<512x256xbf16>, vector<8x256xf32> -> vector<8x256xf32>
    %c0_9 = arith.constant 0 : index
    %c0_10 = arith.constant 0 : index
    %12 = vector.load %arg5[%c0_9, %c0_10] : memref<1x256xf32, #tpu.memory_space<vmem>>, vector<1x256xf32>
    %13 = vector.broadcast %12 : vector<1x256xf32> to vector<8x256xf32>
    %14 = arith.addf %11, %13 : vector<8x256xf32>
    %cst_11 = arith.constant 2.000000e-01 : f32
    %15 = vector.broadcast %cst_11 : f32 to vector<8x256xf32>
    %16 = arith.mulf %15, %14 : vector<8x256xf32>
    %17 = arith.maximumf %14, %16 : vector<8x256xf32>
    %c0_12 = arith.constant 0 : index
    %c0_13 = arith.constant 0 : index
    %18 = vector.load %arg6[%c0_12, %c0_13] : memref<1x256xf32, #tpu.memory_space<vmem>>, vector<1x256xf32>
    %19 = vector.broadcast %18 : vector<1x256xf32> to vector<8x256xf32>
    %20 = arith.mulf %17, %19 : vector<8x256xf32>
    %cst_14 = arith.constant dense<0.000000e+00> : vector<8xf32>
    %21 = vector.multi_reduction <add>, %20, %cst_14 [1] : vector<8x256xf32> to vector<8xf32>
    %22 = vector.shape_cast %21 : vector<8xf32> to vector<8x1xf32>
    %c0_15 = arith.constant 0 : index
    %c0_16 = arith.constant 0 : index
    %23 = vector.load %arg7[%c0_15, %c0_16] : memref<1x1xf32, #tpu.memory_space<vmem>>, vector<1x1xf32>
    %24 = vector.broadcast %23 : vector<1x1xf32> to vector<8x1xf32>
    %25 = arith.addf %22, %24 : vector<8x1xf32>
    %26 = math.absf %25 : vector<8x1xf32>
    %cst_17 = arith.constant 0.000000e+00 : f32
    %27 = vector.broadcast %cst_17 : f32 to vector<8x1xf32>
    %28 = arith.subf %27, %26 : vector<8x1xf32>
    %29 = math.exp %28 : vector<8x1xf32>
    %cst_18 = arith.constant 1.000000e+00 : f32
    %30 = vector.broadcast %cst_18 : f32 to vector<8x1xf32>
    %31 = arith.addf %30, %29 : vector<8x1xf32>
    %32 = tpu.reciprocal %31 : vector<8x1xf32> -> vector<8x1xf32>
    %cst_19 = arith.constant 0.000000e+00 : f32
    %33 = vector.broadcast %cst_19 : f32 to vector<8x1xf32>
    %34 = arith.cmpf oge, %25, %33 : vector<8x1xf32>
    %35 = arith.mulf %29, %32 : vector<8x1xf32>
    %36 = arith.select %34, %32, %35 : vector<8x1xi1>, vector<8x1xf32>
    %c0_20 = arith.constant 0 : index
    %c0_21 = arith.constant 0 : index
    %37 = vector.load %arg8[%c0_20, %c0_21] : memref<8x1xf32, #tpu.memory_space<vmem>>, vector<8x1xf32>
    tpu.vector_store %arg8[%c0_20, %c0_21], %36 {strides = array<i32>} : memref<8x1xf32, #tpu.memory_space<vmem>>, vector<8x1xf32>,
    return
  }
  func.func @transform_0(%arg0: i32) -> (i32, i32) {
    %c0_i32 = arith.constant 0 : i32
    %c0_i32_0 = arith.constant 0 : i32
    return %arg0, %c0_i32 : i32, i32
  }
  func.func @transform_1(%arg0: i32) -> (i32, i32) {
    %c0_i32 = arith.constant 0 : i32
    %c0_i32_0 = arith.constant 0 : i32
    %c0_i32_1 = arith.constant 0 : i32
    return %c0_i32, %c0_i32_0 : i32, i32
  }
  func.func @transform_2(%arg0: i32) -> (i32, i32) {
    %c0_i32 = arith.constant 0 : i32
    %c0_i32_0 = arith.constant 0 : i32
    %c0_i32_1 = arith.constant 0 : i32
    return %c0_i32, %c0_i32_0 : i32, i32
  }
  func.func @transform_3(%arg0: i32) -> (i32, i32) {
    %c0_i32 = arith.constant 0 : i32
    %c0_i32_0 = arith.constant 0 : i32
    %c0_i32_1 = arith.constant 0 : i32
    return %c0_i32, %c0_i32_0 : i32, i32
  }
  func.func @transform_4(%arg0: i32) -> (i32, i32) {
    %c0_i32 = arith.constant 0 : i32
    %c0_i32_0 = arith.constant 0 : i32
    %c0_i32_1 = arith.constant 0 : i32
    return %c0_i32, %c0_i32_0 : i32, i32
  }
  func.func @transform_5(%arg0: i32) -> (i32, i32) {
    %c0_i32 = arith.constant 0 : i32
    %c0_i32_0 = arith.constant 0 : i32
    %c0_i32_1 = arith.constant 0 : i32
    return %c0_i32, %c0_i32_0 : i32, i32
  }
  func.func @transform_6(%arg0: i32) -> (i32, i32) {
    %c0_i32 = arith.constant 0 : i32
    %c0_i32_0 = arith.constant 0 : i32
    %c0_i32_1 = arith.constant 0 : i32
    return %c0_i32, %c0_i32_0 : i32, i32
  }
  func.func @transform_7(%arg0: i32) -> (i32, i32) {
    %c0_i32 = arith.constant 0 : i32
    %c0_i32_0 = arith.constant 0 : i32
    return %arg0, %c0_i32 : i32, i32
  }
}

</mosaic_0001>

<llo_original>
// kernel: discriminator_forward.1
$region0: #{discriminator_forward.1}
  #allocation0 [shape = 'u32[]', space=smem, size = 0x4, offset = 0x4, fixed_abs, tag = 'smem constant byte address 0x4 - core index']
  #allocation1 [shape = 'u32[72,128]{1,0:T(1,128)}', space=vmem, size = 0x9000, scoped, tag = 'internal scratch']
  #allocation2 [shape = 'f32[1,1]{1,0:T(1,128)S(1)}', space=vmem, size = 0x200, scoped, tag = 'scoped memory for discriminator_forward.1']
  %s0 = inlined_call_operand.vmem [shape: bf16[8,36], index: 0, kind: input, shape index: {}]
  %s1 = inlined_call_operand.hbm [shape: bf16[36,512], index: 1, kind: input, shape index: {}]
  %s2 = inlined_call_operand.vmem [shape: f32[1,512], index: 2, kind: input, shape index: {}]
  %s3 = inlined_call_operand.hbm [shape: bf16[512,256], index: 3, kind: input, shape index: {}]
  %s4 = inlined_call_operand.vmem [shape: f32[1,256], index: 4, kind: input, shape index: {}]
  %s5 = inlined_call_operand.vmem [shape: f32[1,256], index: 5, kind: input, shape index: {}]
  %s6 = inlined_call_operand.<no memory space> [shape: f32[1,1], index: 6, kind: input, shape index: {}]
  %s7 = inlined_call_operand.vmem [shape: f32[8,1], index: 7, kind: output, shape index: {}]
  %s8 = sld [smem:[#allocation0]]
  $region46: #{discriminator_forward.1} parent=0
    _
  %s10 = ssub.s32 1, %s8
  %s11 = scalar_select 0, %s10, %s8
  %v12 = vstv %s6
  %13 = vst [vmem:[#allocation2] sm:$0x1] %v12
  $region1: #{discriminator_forward.1} parent=0
    #allocation3 [shape = 'u8[40960]{0}', space=vmem, size = 0xa000, scoped, tag = 'input window, operand 1, single buffered']
    #allocation4 [shape = 's32[1]{0}', space=sflag, size = 0x4, scoped, tag = 'scoped memory for discriminator_forward.1']
    #allocation5 [shape = 'u8[262144]{0}', space=vmem, size = 0x40000, scoped, tag = 'input window, operand 3, single buffered']
    #allocation6 [shape = 's32[1]{0}', space=sflag, size = 0x4, scoped, tag = 'scoped memory for discriminator_forward.1']
    %14 = vsyncpa [#allocation4], 0
    %15 = vsyncpa [#allocation6], 0
    // Predicated region
    $region2: #{discriminator_forward.1} parent=1 // pred_check
      _
    $region3: #{discriminator_forward.1} parent=1 // pred_check_branch
      %17 = sbr.rel (0) target = $region5
    $region4: #{discriminator_forward.1} parent=1 // pred_region
      _
    $region5: #{discriminator_forward.1} parent=1 // pred_fallthru
      _
    // Predicated region
    $region6: #{discriminator_forward.1} parent=1 // pred_check
      _
    $region7: #{discriminator_forward.1} parent=1 // pred_check_branch
      %19 = sbr.rel (0) target = $region9
    $region8: #{discriminator_forward.1} parent=1 // pred_region
      %21 = vsyncadd [#allocation4], 0
      %s22 = sshll.u32 %s1, 4
      %s23 = int_to_ptr.hbm [resolvable:$true] %s22
      %s24 = sshll.u32 [#allocation3], 4
      %s25 = int_to_ptr.vmem [resolvable:$true] %s24
      %30 = dma.hbm_to_vmem [thread:$0]  %s23, 1280, %s25, [#allocation4], 256, 256, 16
    $region9: #{discriminator_forward.1} parent=1 // pred_fallthru
      _
    // Predicated region
    $region10: #{discriminator_forward.1} parent=1 // pred_check
      _
    $region11: #{discriminator_forward.1} parent=1 // pred_check_branch
      %32 = sbr.rel (0) target = $region13
    $region12: #{discriminator_forward.1} parent=1 // pred_region
      _
    $region13: #{discriminator_forward.1} parent=1 // pred_fallthru
      _
    // Predicated region
    $region14: #{discriminator_forward.1} parent=1 // pred_check
      _
    $region15: #{discriminator_forward.1} parent=1 // pred_check_branch
      %34 = sbr.rel (0) target = $region17
    $region16: #{discriminator_forward.1} parent=1 // pred_region
      %36 = vsyncadd [#allocation6], 0
      %s37 = sshll.u32 %s3, 4
      %s38 = int_to_ptr.hbm [resolvable:$true] %s37
      %s39 = sshll.u32 [#allocation5], 4
      %s40 = int_to_ptr.vmem [resolvable:$true] %s39
      %45 = dma.hbm_to_vmem [thread:$0]  %s38, 8192, %s40, [#allocation6], 128, 128, 8
    $region17: #{discriminator_forward.1} parent=1 // pred_fallthru
      _
    // Predicated region
    $region18: #{discriminator_forward.1} parent=1 // pred_check
      _
    $region19: #{discriminator_forward.1} parent=1 // pred_check_branch
      %47 = sbr.rel (0) target = $region21
    $region20: #{discriminator_forward.1} parent=1 // pred_region
      _
    $region21: #{discriminator_forward.1} parent=1 // pred_fallthru
      _
    // Predicated region
    $region22: #{discriminator_forward.1} parent=1 // pred_check
      _
    $region23: #{discriminator_forward.1} parent=1 // pred_check_branch
      %49 = sbr.rel (0) target = $region25
    $region24: #{discriminator_forward.1} parent=1 // pred_region
      _
    $region25: #{discriminator_forward.1} parent=1 // pred_fallthru
      _
    // Predicated region
    $region26: #{discriminator_forward.1} parent=1 // pred_check
      _
    $region27: #{discriminator_forward.1} parent=1 // pred_check_branch
      %51 = sbr.rel (0) target = $region29
    $region28: #{discriminator_forward.1} parent=1 // pred_region
      _
    $region29: #{discriminator_forward.1} parent=1 // pred_fallthru
      _
    // Predicated region
    $region30: #{discriminator_forward.1} parent=1 // pred_check
      _
    $region31: #{discriminator_forward.1} parent=1 // pred_check_branch
      %53 = sbr.rel (0) target = $region33
    $region32: #{discriminator_forward.1} parent=1 // pred_region
      %55 = dma.done [#allocation4], 1280
    $region33: #{discriminator_forward.1} parent=1 // pred_fallthru
      _
    // Predicated region
    $region34: #{discriminator_forward.1} parent=1 // pred_check
      _
    $region35: #{discriminator_forward.1} parent=1 // pred_check_branch
      %57 = sbr.rel (0) target = $region37
    $region36: #{discriminator_forward.1} parent=1 // pred_region
      %59 = dma.done [#allocation6], 8192
    $region37: #{discriminator_forward.1} parent=1 // pred_fallthru
      _
    %v61 = vld [vmem:[%s0] sm:$0xf]
    %v62 = vld [vmem:[#allocation3] sm:$0xff]
    %v63 = vld [vmem:[#allocation3 + $0x8] sm:$0xff]
    %v64 = vld [vmem:[#allocation3 + $0x10] sm:$0xff]
    %v65 = vld [vmem:[#allocation3 + $0x18] sm:$0xff]
    %v66 = vld [vmem:[#allocation3 + $0x20] sm:$0xff]
    %v67 = vld [vmem:[#allocation3 + $0x28] sm:$0xff]
    %v68 = vld [vmem:[#allocation3 + $0x30] sm:$0xff]
    %v69 = vld [vmem:[#allocation3 + $0x38] sm:$0xff]
    %v70 = vld [vmem:[#allocation3 + $0x40] sm:$0x33]
    %v71 = vld [vmem:[#allocation3 + $0x48] sm:$0x33]
    %v72 = vld [vmem:[%s2] sm:$0xf]
    %v74 = vperm.slane %v72, 0
    %v75 = vperm.slane %v72, 1
    %v76 = vperm.slane %v72, 2
    %v77 = vperm.slane %v72, 3
    %v92 = vunpack.c.l.b16 %v62
    %v93 = vunpack.c.h.b16 %v62
    %v94 = vunpack.c.l.b16 %v63
    %v95 = vunpack.c.h.b16 %v63
    %v96 = vunpack.c.l.b16 %v64
    %v97 = vunpack.c.h.b16 %v64
    %v98 = vunpack.c.l.b16 %v65
    %v99 = vunpack.c.h.b16 %v65
    %v100 = vunpack.c.l.b16 %v66
    %v101 = vunpack.c.h.b16 %v66
    %v102 = vunpack.c.l.b16 %v67
    %v103 = vunpack.c.h.b16 %v67
    %v104 = vunpack.c.l.b16 %v68
    %v105 = vunpack.c.h.b16 %v68
    %v106 = vunpack.c.l.b16 %v69
    %v107 = vunpack.c.h.b16 %v69
    %v108 = vunpack.c.l.b16 %v70
    %v109 = vunpack.c.h.b16 %v70
    %v110 = vunpack.c.l.b16 %v71
    %v111 = vunpack.c.h.b16 %v71
    %v112 = vpack.c.b16 %v96, %v92
    %v113 = vpack.c.b16 %v97, %v93
    %v114 = vpack.c.b16 %v98, %v94
    %v115 = vpack.c.b16 %v99, %v95
    %v116 = vpack.c.b16 %v104, %v100
    %v117 = vpack.c.b16 %v105, %v101
    %v118 = vpack.c.b16 %v106, %v102
    %v119 = vpack.c.b16 %v107, %v103
    %v120 = vpack.c.b16 %v108, %v108
    %v121 = vpack.c.b16 %v109, %v109
    %v122 = vpack.c.b16 %v110, %v110
    %v123 = vpack.c.b16 %v111, %v111
    %vm132 = vcmask 293888
    %v134 = vsel %vm132, %v61, 0
    %vm136 = vcmask 1041408
    %v138 = vsel %vm136, %v120, 0
    %v141 = vsel %vm136, %v121, 0
    %v144 = vsel %vm136, %v122, 0
    %v147 = vsel %vm136, %v123, 0
    %149 = vmatpush.bf16.msra.mxu0 0
    %150 = vmatpush.bf16.msra.mxu0 0
    %151 = vmatpush.bf16.msra.mxu0 0
    %152 = vmatpush.bf16.msra.mxu0 0
    %153 = vmatpush.bf16.msra.mxu0 0
    %154 = vmatpush.bf16.msra.mxu0 %v138
    %155 = vmatpush.bf16.msra.mxu0 %v116
    %156 = vmatpush.bf16.msra.mxu0 %v112
    %157 = vmatmul.bf16.gmra.mxu0 %v134
    %v158 = vpop.f32.mrf.mxu0
    %v159 = vadd.f32 %v74, %v158
    %v160 = vpop.f32.mrf.mxu0
    %161 = vdwg.mxu0
    %162 = vmatpush.bf16.msra.mxu0 0
    %163 = vmatpush.bf16.msra.mxu0 0
    %164 = vmatpush.bf16.msra.mxu0 0
    %165 = vmatpush.bf16.msra.mxu0 0
    %166 = vmatpush.bf16.msra.mxu0 0
    %167 = vmatpush.bf16.msra.mxu0 %v141
    %168 = vmatpush.bf16.msra.mxu0 %v117
    %169 = vmatpush.bf16.msra.mxu0 %v113
    %170 = vmatmul.bf16.gmra.mxu0 %v134
    %v171 = vpop.f32.mrf.mxu0
    %v172 = vadd.f32 %v75, %v171
    %v173 = vpop.f32.mrf.mxu0
    %174 = vdwg.mxu0
    %175 = vmatpush.bf16.msra.mxu0 0
    %176 = vmatpush.bf16.msra.mxu0 0
    %177 = vmatpush.bf16.msra.mxu0 0
    %178 = vmatpush.bf16.msra.mxu0 0
    %179 = vmatpush.bf16.msra.mxu0 0
    %180 = vmatpush.bf16.msra.mxu0 %v144
    %181 = vmatpush.bf16.msra.mxu0 %v118
    %182 = vmatpush.bf16.msra.mxu0 %v114
    %183 = vmatmul.bf16.gmra.mxu0 %v134
    %v184 = vpop.f32.mrf.mxu0
    %v185 = vadd.f32 %v76, %v184
    %v186 = vpop.f32.mrf.mxu0
    %187 = vdwg.mxu0
    %188 = vmatpush.bf16.msra.mxu0 0
    %189 = vmatpush.bf16.msra.mxu0 0
    %190 = vmatpush.bf16.msra.mxu0 0
    %191 = vmatpush.bf16.msra.mxu0 0
    %192 = vmatpush.bf16.msra.mxu0 0
    %193 = vmatpush.bf16.msra.mxu0 %v147
    %194 = vmatpush.bf16.msra.mxu0 %v119
    %195 = vmatpush.bf16.msra.mxu0 %v115
    %196 = vmatmul.bf16.gmra.mxu0 %v134
    %v197 = vpop.f32.mrf.mxu0
    %v198 = vadd.f32 %v77, %v197
    %v199 = vpop.f32.mrf.mxu0
    %200 = vdwg.mxu0
    %v201 = vmul.f32 %v159, 0.2
    %v202 = vmul.f32 %v172, 0.2
    %v203 = vmul.f32 %v185, 0.2
    %v204 = vmul.f32 %v198, 0.2
    %v205 = vmax.f32 %v159, %v201
    %v206 = vmax.f32 %v172, %v202
    %v207 = vmax.f32 %v185, %v203
    %v208 = vmax.f32 %v198, %v204
    %v209 = vpack.c.bf16 %v205, %v205
    %v210 = vpack.c.bf16 %v206, %v206
    %v211 = vpack.c.bf16 %v207, %v207
    %v212 = vpack.c.bf16 %v208, %v208
    %v213 = vld [vmem:[#allocation5] sm:$0xff]
    %v214 = vld [vmem:[#allocation5 + $0x8] sm:$0xff]
    %v215 = vld [vmem:[#allocation5 + $0x10] sm:$0xff]
    %v216 = vld [vmem:[#allocation5 + $0x18] sm:$0xff]
    %v217 = vld [vmem:[#allocation5 + $0x20] sm:$0xff]
    %v218 = vld [vmem:[#allocation5 + $0x28] sm:$0xff]
    %v219 = vld [vmem:[#allocation5 + $0x30] sm:$0xff]
    %v220 = vld [vmem:[#allocation5 + $0x38] sm:$0xff]
    %v221 = vld [vmem:[#allocation5 + $0x40] sm:$0xff]
    %v222 = vld [vmem:[#allocation5 + $0x48] sm:$0xff]
    %v223 = vld [vmem:[#allocation5 + $0x50] sm:$0xff]
    %v224 = vld [vmem:[#allocation5 + $0x58] sm:$0xff]
    %v225 = vld [vmem:[#allocation5 + $0x60] sm:$0xff]
    %v226 = vld [vmem:[#allocation5 + $0x68] sm:$0xff]
    %v227 = vld [vmem:[#allocation5 + $0x70] sm:$0xff]
    %v228 = vld [vmem:[#allocation5 + $0x78] sm:$0xff]
    %v229 = vld [vmem:[#allocation5 + $0x80] sm:$0xff]
    %v230 = vld [vmem:[#allocation5 + $0x88] sm:$0xff]
    %v231 = vld [vmem:[#allocation5 + $0x90] sm:$0xff]
    %v232 = vld [vmem:[#allocation5 + $0x98] sm:$0xff]
    %v233 = vld [vmem:[#allocation5 + $0xa0] sm:$0xff]
    %v234 = vld [vmem:[#allocation5 + $0xa8] sm:$0xff]
    %v235 = vld [vmem:[#allocation5 + $0xb0] sm:$0xff]
    %v236 = vld [vmem:[#allocation5 + $0xb8] sm:$0xff]
    %v237 = vld [vmem:[#allocation5 + $0xc0] sm:$0xff]
    %v238 = vld [vmem:[#allocation5 + $0xc8] sm:$0xff]
    %v239 = vld [vmem:[#allocation5 + $0xd0] sm:$0xff]
    %v240 = vld [vmem:[#allocation5 + $0xd8] sm:$0xff]
    %v241 = vld [vmem:[#allocation5 + $0xe0] sm:$0xff]
    %v242 = vld [vmem:[#allocation5 + $0xe8] sm:$0xff]
    %v243 = vld [vmem:[#allocation5 + $0xf0] sm:$0xff]
    %v244 = vld [vmem:[#allocation5 + $0xf8] sm:$0xff]
    %v245 = vld [vmem:[#allocation5 + $0x100] sm:$0xff]
    %v246 = vld [vmem:[#allocation5 + $0x108] sm:$0xff]
    %v247 = vld [vmem:[#allocation5 + $0x110] sm:$0xff]
    %v248 = vld [vmem:[#allocation5 + $0x118] sm:$0xff]
    %v249 = vld [vmem:[#allocation5 + $0x120] sm:$0xff]
    %v250 = vld [vmem:[#allocation5 + $0x128] sm:$0xff]
    %v251 = vld [vmem:[#allocation5 + $0x130] sm:$0xff]
    %v252 = vld [vmem:[#allocation5 + $0x138] sm:$0xff]
    %v253 = vld [vmem:[#allocation5 + $0x140] sm:$0xff]
    %v254 = vld [vmem:[#allocation5 + $0x148] sm:$0xff]
    %v255 = vld [vmem:[#allocation5 + $0x150] sm:$0xff]
    %v256 = vld [vmem:[#allocation5 + $0x158] sm:$0xff]
    %v257 = vld [vmem:[#allocation5 + $0x160] sm:$0xff]
    %v258 = vld [vmem:[#allocation5 + $0x168] sm:$0xff]
    %v259 = vld [vmem:[#allocation5 + $0x170] sm:$0xff]
    %v260 = vld [vmem:[#allocation5 + $0x178] sm:$0xff]
    %v261 = vld [vmem:[#allocation5 + $0x180] sm:$0xff]
    %v262 = vld [vmem:[#allocation5 + $0x188] sm:$0xff]
    %v263 = vld [vmem:[#allocation5 + $0x190] sm:$0xff]
    %v264 = vld [vmem:[#allocation5 + $0x198] sm:$0xff]
    %v265 = vld [vmem:[#allocation5 + $0x1a0] sm:$0xff]
    %v266 = vld [vmem:[#allocation5 + $0x1a8] sm:$0xff]
    %v267 = vld [vmem:[#allocation5 + $0x1b0] sm:$0xff]
    %v268 = vld [vmem:[#allocation5 + $0x1b8] sm:$0xff]
    %v269 = vld [vmem:[#allocation5 + $0x1c0] sm:$0xff]
    %v270 = vld [vmem:[#allocation5 + $0x1c8] sm:$0xff]
    %v271 = vld [vmem:[#allocation5 + $0x1d0] sm:$0xff]
    %v272 = vld [vmem:[#allocation5 + $0x1d8] sm:$0xff]
    %v273 = vld [vmem:[#allocation5 + $0x1e0] sm:$0xff]
    %v274 = vld [vmem:[#allocation5 + $0x1e8] sm:$0xff]
    %v275 = vld [vmem:[#allocation5 + $0x1f0] sm:$0xff]
    %v276 = vld [vmem:[#allocation5 + $0x1f8] sm:$0xff]
    %v277 = vld [vmem:[%s4] sm:$0x3]
    %v279 = vperm.slane %v277, 0
    %v280 = vperm.slane %v277, 1
    %v347 = vunpack.c.l.b16 %v213
    %v348 = vunpack.c.h.b16 %v213
    %v349 = vunpack.c.l.b16 %v214
    %v350 = vunpack.c.h.b16 %v214
    %v351 = vunpack.c.l.b16 %v215
    %v352 = vunpack.c.h.b16 %v215
    %v353 = vunpack.c.l.b16 %v216
    %v354 = vunpack.c.h.b16 %v216
    %v355 = vunpack.c.l.b16 %v217
    %v356 = vunpack.c.h.b16 %v217
    %v357 = vunpack.c.l.b16 %v218
    %v358 = vunpack.c.h.b16 %v218
    %v359 = vunpack.c.l.b16 %v219
    %v360 = vunpack.c.h.b16 %v219
    %v361 = vunpack.c.l.b16 %v220
    %v362 = vunpack.c.h.b16 %v220
    %v363 = vunpack.c.l.b16 %v221
    %v364 = vunpack.c.h.b16 %v221
    %v365 = vunpack.c.l.b16 %v222
    %v366 = vunpack.c.h.b16 %v222
    %v367 = vunpack.c.l.b16 %v223
    %v368 = vunpack.c.h.b16 %v223
    %v369 = vunpack.c.l.b16 %v224
    %v370 = vunpack.c.h.b16 %v224
    %v371 = vunpack.c.l.b16 %v225
    %v372 = vunpack.c.h.b16 %v225
    %v373 = vunpack.c.l.b16 %v226
    %v374 = vunpack.c.h.b16 %v226
    %v375 = vunpack.c.l.b16 %v227
    %v376 = vunpack.c.h.b16 %v227
    %v377 = vunpack.c.l.b16 %v228
    %v378 = vunpack.c.h.b16 %v228
    %v379 = vunpack.c.l.b16 %v229
    %v380 = vunpack.c.h.b16 %v229
    %v381 = vunpack.c.l.b16 %v230
    %v382 = vunpack.c.h.b16 %v230
    %v383 = vunpack.c.l.b16 %v231
    %v384 = vunpack.c.h.b16 %v231
    %v385 = vunpack.c.l.b16 %v232
    %v386 = vunpack.c.h.b16 %v232
    %v387 = vunpack.c.l.b16 %v233
    %v388 = vunpack.c.h.b16 %v233
    %v389 = vunpack.c.l.b16 %v234
    %v390 = vunpack.c.h.b16 %v234
    %v391 = vunpack.c.l.b16 %v235
    %v392 = vunpack.c.h.b16 %v235
    %v393 = vunpack.c.l.b16 %v236
    %v394 = vunpack.c.h.b16 %v236
    %v395 = vunpack.c.l.b16 %v237
    %v396 = vunpack.c.h.b16 %v237
    %v397 = vunpack.c.l.b16 %v238
    %v398 = vunpack.c.h.b16 %v238
    %v399 = vunpack.c.l.b16 %v239
    %v400 = vunpack.c.h.b16 %v239
    %v401 = vunpack.c.l.b16 %v240
    %v402 = vunpack.c.h.b16 %v240
    %v403 = vunpack.c.l.b16 %v241
    %v404 = vunpack.c.h.b16 %v241
    %v405 = vunpack.c.l.b16 %v242
    %v406 = vunpack.c.h.b16 %v242
    %v407 = vunpack.c.l.b16 %v243
    %v408 = vunpack.c.h.b16 %v243
    %v409 = vunpack.c.l.b16 %v244
    %v410 = vunpack.c.h.b16 %v244
    %v411 = vunpack.c.l.b16 %v245
    %v412 = vunpack.c.h.b16 %v245
    %v413 = vunpack.c.l.b16 %v246
    %v414 = vunpack.c.h.b16 %v246
    %v415 = vunpack.c.l.b16 %v247
    %v416 = vunpack.c.h.b16 %v247
    %v417 = vunpack.c.l.b16 %v248
    %v418 = vunpack.c.h.b16 %v248
    %v419 = vunpack.c.l.b16 %v249
    %v420 = vunpack.c.h.b16 %v249
    %v421 = vunpack.c.l.b16 %v250
    %v422 = vunpack.c.h.b16 %v250
    %v423 = vunpack.c.l.b16 %v251
    %v424 = vunpack.c.h.b16 %v251
    %v425 = vunpack.c.l.b16 %v252
    %v426 = vunpack.c.h.b16 %v252
    %v427 = vunpack.c.l.b16 %v253
    %v428 = vunpack.c.h.b16 %v253
    %v429 = vunpack.c.l.b16 %v254
    %v430 = vunpack.c.h.b16 %v254
    %v431 = vunpack.c.l.b16 %v255
    %v432 = vunpack.c.h.b16 %v255
    %v433 = vunpack.c.l.b16 %v256
    %v434 = vunpack.c.h.b16 %v256
    %v435 = vunpack.c.l.b16 %v257
    %v436 = vunpack.c.h.b16 %v257
    %v437 = vunpack.c.l.b16 %v258
    %v438 = vunpack.c.h.b16 %v258
    %v439 = vunpack.c.l.b16 %v259
    %v440 = vunpack.c.h.b16 %v259
    %v441 = vunpack.c.l.b16 %v260
    %v442 = vunpack.c.h.b16 %v260
    %v443 = vunpack.c.l.b16 %v261
    %v444 = vunpack.c.h.b16 %v261
    %v445 = vunpack.c.l.b16 %v262
    %v446 = vunpack.c.h.b16 %v262
    %v447 = vunpack.c.l.b16 %v263
    %v448 = vunpack.c.h.b16 %v263
    %v449 = vunpack.c.l.b16 %v264
    %v450 = vunpack.c.h.b16 %v264
    %v451 = vunpack.c.l.b16 %v265
    %v452 = vunpack.c.h.b16 %v265
    %v453 = vunpack.c.l.b16 %v266
    %v454 = vunpack.c.h.b16 %v266
    %v455 = vunpack.c.l.b16 %v267
    %v456 = vunpack.c.h.b16 %v267
    %v457 = vunpack.c.l.b16 %v268
    %v458 = vunpack.c.h.b16 %v268
    %v459 = vunpack.c.l.b16 %v269
    %v460 = vunpack.c.h.b16 %v269
    %v461 = vunpack.c.l.b16 %v270
    %v462 = vunpack.c.h.b16 %v270
    %v463 = vunpack.c.l.b16 %v271
    %v464 = vunpack.c.h.b16 %v271
    %v465 = vunpack.c.l.b16 %v272
    %v466 = vunpack.c.h.b16 %v272
    %v467 = vunpack.c.l.b16 %v273
    %v468 = vunpack.c.h.b16 %v273
    %v469 = vunpack.c.l.b16 %v274
    %v470 = vunpack.c.h.b16 %v274
    %v471 = vunpack.c.l.b16 %v275
    %v472 = vunpack.c.h.b16 %v275
    %v473 = vunpack.c.l.b16 %v276
    %v474 = vunpack.c.h.b16 %v276
    %v475 = vpack.c.b16 %v349, %v347
    %v476 = vpack.c.b16 %v350, %v348
    %v477 = vpack.c.b16 %v353, %v351
    %v478 = vpack.c.b16 %v354, %v352
    %v479 = vpack.c.b16 %v357, %v355
    %v480 = vpack.c.b16 %v358, %v356
    %v481 = vpack.c.b16 %v361, %v359
    %v482 = vpack.c.b16 %v362, %v360
    %v483 = vpack.c.b16 %v365, %v363
    %v484 = vpack.c.b16 %v366, %v364
    %v485 = vpack.c.b16 %v369, %v367
    %v486 = vpack.c.b16 %v370, %v368
    %v487 = vpack.c.b16 %v373, %v371
    %v488 = vpack.c.b16 %v374, %v372
    %v489 = vpack.c.b16 %v377, %v375
    %v490 = vpack.c.b16 %v378, %v376
    %v491 = vpack.c.b16 %v381, %v379
    %v492 = vpack.c.b16 %v382, %v380
    %v493 = vpack.c.b16 %v385, %v383
    %v494 = vpack.c.b16 %v386, %v384
    %v495 = vpack.c.b16 %v389, %v387
    %v496 = vpack.c.b16 %v390, %v388
    %v497 = vpack.c.b16 %v393, %v391
    %v498 = vpack.c.b16 %v394, %v392
    %v499 = vpack.c.b16 %v397, %v395
    %v500 = vpack.c.b16 %v398, %v396
    %v501 = vpack.c.b16 %v401, %v399
    %v502 = vpack.c.b16 %v402, %v400
    %v503 = vpack.c.b16 %v405, %v403
    %v504 = vpack.c.b16 %v406, %v404
    %v505 = vpack.c.b16 %v409, %v407
    %v506 = vpack.c.b16 %v410, %v408
    %v507 = vpack.c.b16 %v413, %v411
    %v508 = vpack.c.b16 %v414, %v412
    %v509 = vpack.c.b16 %v417, %v415
    %v510 = vpack.c.b16 %v418, %v416
    %v511 = vpack.c.b16 %v421, %v419
    %v512 = vpack.c.b16 %v422, %v420
    %v513 = vpack.c.b16 %v425, %v423
    %v514 = vpack.c.b16 %v426, %v424
    %v515 = vpack.c.b16 %v429, %v427
    %v516 = vpack.c.b16 %v430, %v428
    %v517 = vpack.c.b16 %v433, %v431
    %v518 = vpack.c.b16 %v434, %v432
    %v519 = vpack.c.b16 %v437, %v435
    %v520 = vpack.c.b16 %v438, %v436
    %v521 = vpack.c.b16 %v441, %v439
    %v522 = vpack.c.b16 %v442, %v440
    %v523 = vpack.c.b16 %v445, %v443
    %v524 = vpack.c.b16 %v446, %v444
    %v525 = vpack.c.b16 %v449, %v447
    %v526 = vpack.c.b16 %v450, %v448
    %v527 = vpack.c.b16 %v453, %v451
    %v528 = vpack.c.b16 %v454, %v452
    %v529 = vpack.c.b16 %v457, %v455
    %v530 = vpack.c.b16 %v458, %v456
    %v531 = vpack.c.b16 %v461, %v459
    %v532 = vpack.c.b16 %v462, %v460
    %v533 = vpack.c.b16 %v465, %v463
    %v534 = vpack.c.b16 %v466, %v464
    %v535 = vpack.c.b16 %v469, %v467
    %v536 = vpack.c.b16 %v470, %v468
    %v537 = vpack.c.b16 %v473, %v471
    %v538 = vpack.c.b16 %v474, %v472
    %603 = vmatpush.bf16.msra.mxu0 %v489
    %604 = vmatpush.bf16.msra.mxu0 %v487
    %605 = vmatpush.bf16.msra.mxu0 %v485
    %606 = vmatpush.bf16.msra.mxu0 %v483
    %607 = vmatpush.bf16.msra.mxu0 %v481
    %608 = vmatpush.bf16.msra.mxu0 %v479
    %609 = vmatpush.bf16.msra.mxu0 %v477
    %610 = vmatpush.bf16.msra.mxu0 %v475
    %611 = vmatmul.bf16.gmra.mxu0 %v209
    %v612 = vpop.f32.mrf.mxu0
    %v613 = vadd.f32 %v279, %v612
    %v614 = vpop.f32.mrf.mxu0
    %615 = vdwg.mxu0
    %616 = vmatpush.bf16.msra.mxu0 %v505
    %617 = vmatpush.bf16.msra.mxu0 %v503
    %618 = vmatpush.bf16.msra.mxu0 %v501
    %619 = vmatpush.bf16.msra.mxu0 %v499
    %620 = vmatpush.bf16.msra.mxu0 %v497
    %621 = vmatpush.bf16.msra.mxu0 %v495
    %622 = vmatpush.bf16.msra.mxu0 %v493
    %623 = vmatpush.bf16.msra.mxu0 %v491
    %624 = vmatmul.bf16.gmra.mxu0 %v210
    %v625 = vpop.f32.mrf.mxu0
    %v626 = vadd.f32 %v613, %v625
    %v627 = vpop.f32.mrf.mxu0
    %628 = vdwg.mxu0
    %629 = vmatpush.bf16.msra.mxu0 %v521
    %630 = vmatpush.bf16.msra.mxu0 %v519
    %631 = vmatpush.bf16.msra.mxu0 %v517
    %632 = vmatpush.bf16.msra.mxu0 %v515
    %633 = vmatpush.bf16.msra.mxu0 %v513
    %634 = vmatpush.bf16.msra.mxu0 %v511
    %635 = vmatpush.bf16.msra.mxu0 %v509
    %636 = vmatpush.bf16.msra.mxu0 %v507
    %637 = vmatmul.bf16.gmra.mxu0 %v211
    %v638 = vpop.f32.mrf.mxu0
    %v639 = vadd.f32 %v626, %v638
    %v640 = vpop.f32.mrf.mxu0
    %641 = vdwg.mxu0
    %642 = vmatpush.bf16.msra.mxu0 %v537
    %643 = vmatpush.bf16.msra.mxu0 %v535
    %644 = vmatpush.bf16.msra.mxu0 %v533
    %645 = vmatpush.bf16.msra.mxu0 %v531
    %646 = vmatpush.bf16.msra.mxu0 %v529
    %647 = vmatpush.bf16.msra.mxu0 %v527
    %648 = vmatpush.bf16.msra.mxu0 %v525
    %649 = vmatpush.bf16.msra.mxu0 %v523
    %650 = vmatmul.bf16.gmra.mxu0 %v212
    %v651 = vpop.f32.mrf.mxu0
    %v652 = vadd.f32 %v639, %v651
    %v653 = vpop.f32.mrf.mxu0
    %654 = vdwg.mxu0
    %655 = vmatpush.bf16.msra.mxu0 %v490
    %656 = vmatpush.bf16.msra.mxu0 %v488
    %657 = vmatpush.bf16.msra.mxu0 %v486
    %658 = vmatpush.bf16.msra.mxu0 %v484
    %659 = vmatpush.bf16.msra.mxu0 %v482
    %660 = vmatpush.bf16.msra.mxu0 %v480
    %661 = vmatpush.bf16.msra.mxu0 %v478
    %662 = vmatpush.bf16.msra.mxu0 %v476
    %663 = vmatmul.bf16.gmra.mxu0 %v209
    %v664 = vpop.f32.mrf.mxu0
    %v665 = vadd.f32 %v280, %v664
    %v666 = vpop.f32.mrf.mxu0
    %667 = vdwg.mxu0
    %668 = vmatpush.bf16.msra.mxu0 %v506
    %669 = vmatpush.bf16.msra.mxu0 %v504
    %670 = vmatpush.bf16.msra.mxu0 %v502
    %671 = vmatpush.bf16.msra.mxu0 %v500
    %672 = vmatpush.bf16.msra.mxu0 %v498
    %673 = vmatpush.bf16.msra.mxu0 %v496
    %674 = vmatpush.bf16.msra.mxu0 %v494
    %675 = vmatpush.bf16.msra.mxu0 %v492
    %676 = vmatmul.bf16.gmra.mxu0 %v210
    %v677 = vpop.f32.mrf.mxu0
    %v678 = vadd.f32 %v665, %v677
    %v679 = vpop.f32.mrf.mxu0
    %680 = vdwg.mxu0
    %681 = vmatpush.bf16.msra.mxu0 %v522
    %682 = vmatpush.bf16.msra.mxu0 %v520
    %683 = vmatpush.bf16.msra.mxu0 %v518
    %684 = vmatpush.bf16.msra.mxu0 %v516
    %685 = vmatpush.bf16.msra.mxu0 %v514
    %686 = vmatpush.bf16.msra.mxu0 %v512
    %687 = vmatpush.bf16.msra.mxu0 %v510
    %688 = vmatpush.bf16.msra.mxu0 %v508
    %689 = vmatmul.bf16.gmra.mxu0 %v211
    %v690 = vpop.f32.mrf.mxu0
    %v691 = vadd.f32 %v678, %v690
    %v692 = vpop.f32.mrf.mxu0
    %693 = vdwg.mxu0
    %694 = vmatpush.bf16.msra.mxu0 %v538
    %695 = vmatpush.bf16.msra.mxu0 %v536
    %696 = vmatpush.bf16.msra.mxu0 %v534
    %697 = vmatpush.bf16.msra.mxu0 %v532
    %698 = vmatpush.bf16.msra.mxu0 %v530
    %699 = vmatpush.bf16.msra.mxu0 %v528
    %700 = vmatpush.bf16.msra.mxu0 %v526
    %701 = vmatpush.bf16.msra.mxu0 %v524
    %702 = vmatmul.bf16.gmra.mxu0 %v212
    %v703 = vpop.f32.mrf.mxu0
    %v704 = vadd.f32 %v691, %v703
    %v705 = vpop.f32.mrf.mxu0
    %706 = vdwg.mxu0
    %v707 = vmul.f32 %v652, 0.2
    %v708 = vmul.f32 %v704, 0.2
    %v709 = vmax.f32 %v652, %v707
    %v710 = vmax.f32 %v704, %v708
    %v711 = vld [vmem:[%s5] sm:$0x3]
    %v713 = vperm.slane %v711, 0
    %v714 = vperm.slane %v711, 1
    %v717 = vmul.f32 %v709, %v713
    %v718 = vmul.f32 %v710, %v714
    %v719 = vadd.f32 %v717, %v718
    %720 = vadd.xlane.f32.xlu0 %v719
    %v721 = vpop.xlane.xlu0 %720
    %v722 = vld [vmem:[#allocation2] sm:$0x1]
    %v724 = vperm.slane %v722, 0
    %v726 = vadd.f32 %v721, %v724
    %v727 = vand.u32 2147483647, %v726
    %v728 = vsub.f32 0.0, %v727
    %v729 = vmul.f32 %v728, 1.442695
    %v730 = vpow.pop %v729
    %v731 = vadd.f32 %v730, 1.0
    %v732 = vrcp.pop %v731
    %v733 = vmul.f32 %v731, %v732
    %v734 = vsub.f32 1.0, %v733
    %v735 = vmul.f32 %v732, %v734
    %v736 = vadd.f32 %v732, %v735
    %vm737 = vweird.f32 %v731
    %vm738 = vweird.f32 %v732
    %vm739 = vmor %vm737, %vm738
    %v740 = vsel %vm739, %v732, %v736
    %v741 = vand.u32 2147483647, %v731
    %vm742 = vcmp.eq.f32.partialorder %v741, 8.507059e+37
    %v743 = vand.u32 %v731, 2147483648
    %v744 = vor.u32 1.1754944e-38, %v743
    %v745 = vsel %vm742, %v744, %v740
    %vm746 = vcmp.ge.f32.partialorder %v726, 0.0
    %v747 = vmul.f32 %v730, %v745
    %v748 = vsel %vm746, %v745, %v747
    %vm749 = vcmask 7168
    %750 = vst.msk [vmem:[%s7] sm:$0xff] %vm749, %v748
    // Predicated region
    $region38: #{discriminator_forward.1} parent=1 // pred_check
      _
    $region39: #{discriminator_forward.1} parent=1 // pred_check_branch
      %752 = sbr.rel (0) target = $region41
    $region40: #{discriminator_forward.1} parent=1 // pred_region
      _
    $region41: #{discriminator_forward.1} parent=1 // pred_fallthru
      _
    // Predicated region
    $region42: #{discriminator_forward.1} parent=1 // pred_check
      _
    $region43: #{discriminator_forward.1} parent=1 // pred_check_branch
      %754 = sbr.rel (0) target = $region45
    $region44: #{discriminator_forward.1} parent=1 // pred_region
      _
    $region45: #{discriminator_forward.1} parent=1 // pred_fallthru
      _
    %755 = vsyncpa [#allocation4], 1
    %756 = vsyncpa [#allocation6], 1

</llo_original>
